<compile_context>
chip_gen: v7x
topology: tpu7x:2x2x1
jax: 0.10.0
libtpu: 0.0.40
codegen_flags: <defaults>
</compile_context>

<pallas_src>
import jax
import jax.numpy as jnp
from jax import lax
from jax.experimental import pallas as pl
from jax.experimental.pallas import tpu as pltpu

LANES = 128
SUBLANES = 8
CHUNK_ROWS = 128               # streaming chunk: 128x128 f32 = 16 vregs/input
TARGET_BLOCK_ROWS = 8192       # 8192*128*4B = 4 MiB per f32 input block


def _round_up(a: int, b: int) -> int:
    return ((a + b - 1) // b) * b


def _make_ssd_kernel(rows: int, block_rows: int, blocks_per_shard: int,
                     needs_mask: bool):
    """Kernel accumulating sum of squared diffs into a (1, 8, 128) slab."""
    num_chunks = block_rows // CHUNK_ROWS
    unroll = num_chunks if num_chunks <= 8 else 8

    def block_ssd(x_ref, r_ref, gb, masked: bool):
        # Stream over CHUNK_ROWS-row chunks; keep the accumulator in vregs so
        # the (block_rows, 128) squared-diff is never materialized in VMEM.
        def body(ci, acc):
            start = pl.multiple_of(ci * CHUNK_ROWS, CHUNK_ROWS)
            xs = x_ref[pl.ds(start, CHUNK_ROWS), :].astype(jnp.float32)
            rs = r_ref[pl.ds(start, CHUNK_ROWS), :].astype(jnp.float32)
            d = xs - rs
            dd = d * d
            if masked:
                # Zero rows that lie past the end of the (rows, 128) array
                # (partial last block / clamped duplicate block).
                row = lax.broadcasted_iota(jnp.int32, dd.shape, 0)
                grow = gb * block_rows + start + row
                dd = jnp.where(grow < rows, dd, 0.0)
            return acc + dd

        acc = lax.fori_loop(0, num_chunks, body,
                            jnp.zeros((CHUNK_ROWS, LANES), jnp.float32),
                            unroll=unroll)
        # Fold the chunk accumulator onto one (8, 128) vreg slab (VPU adds).
        return jnp.sum(acc.reshape(CHUNK_ROWS // SUBLANES, SUBLANES, LANES),
                       axis=0)

    def kernel(x_ref, r_ref, out_ref):
        c = pl.program_id(0)          # shard (parallel axis)
        j = pl.program_id(1)          # block within shard (reduction axis)
        gb = c * blocks_per_shard + j  # global block index (unclamped)

        @pl.when(j == 0)
        def _():
            out_ref[...] = jnp.zeros_like(out_ref)

        if needs_mask:
            overhangs = (gb + 1) * block_rows > rows

            @pl.when(overhangs)
            def _():
                out_ref[...] += block_ssd(x_ref, r_ref, gb, True)[None]

            @pl.when(jnp.logical_not(overhangs))
            def _():
                out_ref[...] += block_ssd(x_ref, r_ref, gb, False)[None]
        else:
            out_ref[...] += block_ssd(x_ref, r_ref, gb, False)[None]

    return kernel


def autoencoder_loss(x: jax.Array, x_recon: jax.Array) -> jax.Array:
    """MSE(x_recon, x) with reduction='mean' (matches nn.MSELoss)."""
    assert x.shape == x_recon.shape, "shapes must match"
    n = x.size

    xf = x.reshape(-1)          # contiguous reshape: free, native dtype kept
    rf = x_recon.reshape(-1)

    rows = n // LANES           # full 128-lane rows handled by the kernel
    tail = n - rows * LANES     # <128 leftover elements handled in wrapper

    ssd = jnp.zeros((), jnp.float32)

    if rows > 0:
        main = rows * LANES
        if tail:
            # Rare path (numel % 128 != 0): slice off the lane-aligned prefix.
            xm = lax.slice(xf, (0,), (main,)).reshape(rows, LANES)
            rm = lax.slice(rf, (0,), (main,)).reshape(rows, LANES)
        else:
            # Common path: pure bitcast reshape, zero extra HBM traffic.
            xm = xf.reshape(rows, LANES)
            rm = rf.reshape(rows, LANES)

        block_rows = min(TARGET_BLOCK_ROWS, _round_up(rows, CHUNK_ROWS))
        n_blocks = pl.cdiv(rows, block_rows)
        # Leading parallel axis of size 2 (one accumulator per TC on v7x);
        # only when there is enough work for two shards.
        num_shards = 2 if n_blocks >= 2 else 1
        blocks_per_shard = pl.cdiv(n_blocks, num_shards)
        total_iter_blocks = num_shards * blocks_per_shard
        needs_mask = (total_iter_blocks * block_rows) != rows

        kernel = _make_ssd_kernel(rows, block_rows, blocks_per_shard,
                                  needs_mask)

        # Clamp so an odd block count never produces an out-of-range block
        # index; the clamped duplicate block is fully masked to zero.
        def in_idx(c, j):
            return (jnp.minimum(c * blocks_per_shard + j, n_blocks - 1), 0)

        partials = pl.pallas_call(
            kernel,
            out_shape=jax.ShapeDtypeStruct((num_shards, SUBLANES, LANES),
                                           jnp.float32),
            grid_spec=pltpu.PrefetchScalarGridSpec(
                num_scalar_prefetch=0,
                grid=(num_shards, blocks_per_shard),
                in_specs=[
                    pl.BlockSpec((block_rows, LANES), in_idx),
                    pl.BlockSpec((block_rows, LANES), in_idx),
                ],
                # Accumulator: same block index across the reduction axis j.
                out_specs=pl.BlockSpec((1, SUBLANES, LANES),
                                       lambda c, j: (c, 0, 0)),
            ),
            compiler_params=pltpu.CompilerParams(
                dimension_semantics=("parallel", "arbitrary"),
                # 2 inputs x 2 buffers x 4 MiB (f32, 8192 rows) = 16 MiB;
                # 40 MiB gives headroom and fits every generation's VMEM.
                vmem_limit_bytes=40 * 1024 * 1024,
            ),
        )(xm, rm)

        ssd = ssd + jnp.sum(partials)

    if tail:
        # Tiny (<128 element) tail: compute directly in the wrapper instead of
        # padding (and re-copying) the whole tensor.
        xt = lax.slice(xf, (rows * LANES,), (n,)).astype(jnp.float32)
        rt = lax.slice(rf, (rows * LANES,), (n,)).astype(jnp.float32)
        ssd = ssd + jnp.sum((xt - rt) ** 2)

    return (ssd / jnp.float32(n)).astype(jnp.float32)


if __name__ == "__main__":
    key = jax.random.PRNGKey(0)
    k1, k2 = jax.random.split(key)
    # Small NCHW shape consistent with an autoencoder: (2, 4, 16, 16)
    x = jax.random.normal(k1, (2, 4, 16, 16), dtype=jnp.float32)
    x_recon = jax.random.normal(k2, (2, 4, 16, 16), dtype=jnp.float32)

    loss_fn = jax.jit(autoencoder_loss)
    loss = loss_fn(x, x_recon)
    jax.block_until_ready(loss)

    # Reference check against plain JAX mean-squared-error.
    ref = jnp.mean((x_recon - x) ** 2)
    assert jnp.allclose(loss, ref, rtol=1e-5, atol=1e-6), (loss, ref)

    print("KERNEL_OK")
</pallas_src>

<mosaic_0001>
module attributes {stable_mosaic.version = 11 : i64} {
  func.func @kernel(%arg0: i32, %arg1: i32, %arg2: memref<128x128xf32, #tpu.memory_space<vmem>>, %arg3: memref<128x128xf32, #tpu.memory_space<vmem>>, %arg4: memref<1x8x128xf32, #tpu.memory_space<vmem>>) attributes {dimension_semantics = [#tpu.dimension_semantics<parallel>, #tpu.dimension_semantics<arbitrary>], iteration_bounds = array<i64: 1, 1>, scalar_prefetch = 0 : i64, scratch_operands = 0 : i64, tpu.core_type = #tpu.core_type<tc>, window_params = [{transform_indices = @transform_0, window_bounds = array<i64: 128, 128>}, {transform_indices = @transform_1, window_bounds = array<i64: 128, 128>}, {transform_indices = @transform_2, window_bounds = array<i64: 1, 8, 128>}]} {
    %c1_i32 = arith.constant 1 : i32
    %0 = arith.muli %arg0, %c1_i32 : i32
    %1 = arith.addi %0, %arg1 : i32
    %c0_i32 = arith.constant 0 : i32
    %2 = arith.cmpi eq, %arg1, %c0_i32 : i32
    %3 = arith.extui %2 : i1 to i32
    %c0_i32_0 = arith.constant 0 : i32
    %4 = arith.cmpi ne, %3, %c0_i32_0 : i32
    scf.if %4 {
      %cst = arith.constant 0.000000e+00 : f32
      %13 = vector.broadcast %cst : f32 to vector<1x8x128xf32>
      %c0 = arith.constant 0 : index
      %c0_4 = arith.constant 0 : index
      %c0_5 = arith.constant 0 : index
      %14 = vector.load %arg4[%c0, %c0_4, %c0_5] : memref<1x8x128xf32, #tpu.memory_space<vmem>>, vector<1x8x128xf32>
      tpu.vector_store %arg4[%c0, %c0_4, %c0_5], %13 {strides = array<i32>} : memref<1x8x128xf32, #tpu.memory_space<vmem>>, vector<1x8x128xf32>,
    } else {
    }
    %c1_i32_1 = arith.constant 1 : i32
    %5 = arith.addi %1, %c1_i32_1 : i32
    %c128_i32 = arith.constant 128 : i32
    %6 = arith.muli %5, %c128_i32 : i32
    %c16_i32 = arith.constant 16 : i32
    %7 = arith.cmpi sgt, %6, %c16_i32 : i32
    %8 = arith.extui %7 : i1 to i32
    %c0_i32_2 = arith.constant 0 : i32
    %9 = arith.cmpi ne, %8, %c0_i32_2 : i32
    scf.if %9 {
      %c0 = arith.constant 0 : index
      %c0_4 = arith.constant 0 : index
      %c0_5 = arith.constant 0 : index
      %13 = vector.load %arg4[%c0, %c0_4, %c0_5] : memref<1x8x128xf32, #tpu.memory_space<vmem>>, vector<1x8x128xf32>
      %cst = arith.constant 0.000000e+00 : f32
      %14 = vector.broadcast %cst : f32 to vector<128x128xf32>
      %c0_i32_6 = arith.constant 0 : i32
      %c128_i32_7 = arith.constant 128 : i32
      %15 = arith.muli %c0_i32_6, %c128_i32_7 : i32
      %16 = tpu.assume_multiple %15, 128 : i32
      %17 = arith.index_cast %16 : i32 to index
      %c0_8 = arith.constant 0 : index
      %18 = vector.load %arg2[%17, %c0_8] : memref<128x128xf32, #tpu.memory_space<vmem>>, vector<128x128xf32>
      %19 = arith.index_cast %16 : i32 to index
      %c0_9 = arith.constant 0 : index
      %20 = vector.load %arg3[%19, %c0_9] : memref<128x128xf32, #tpu.memory_space<vmem>>, vector<128x128xf32>
      %21 = arith.subf %18, %20 : vector<128x128xf32>
      %22 = arith.mulf %21, %21 : vector<128x128xf32>
      %23 = tpu.iota {dimensions = array<i32: 0>} : vector<128x128xi32>
      %c128_i32_10 = arith.constant 128 : i32
      %24 = arith.muli %1, %c128_i32_10 : i32
      %25 = arith.addi %24, %16 : i32
      %26 = vector.broadcast %25 : i32 to vector<128x128xi32>
      %27 = arith.addi %26, %23 : vector<128x128xi32>
      %c16_i32_11 = arith.constant 16 : i32
      %28 = vector.broadcast %c16_i32_11 : i32 to vector<128x128xi32>
      %29 = arith.cmpi slt, %27, %28 : vector<128x128xi32>
      %cst_12 = arith.constant 0.000000e+00 : f32
      %30 = vector.broadcast %cst_12 : f32 to vector<128x128xf32>
      %31 = arith.select %29, %22, %30 : vector<128x128xi1>, vector<128x128xf32>
      %32 = arith.addf %14, %31 : vector<128x128xf32>
      %c1_i32_13 = arith.constant 1 : i32
      %33 = vector.shape_cast %32 : vector<128x128xf32> to vector<16x8x128xf32>
      %cst_14 = arith.constant dense<0.000000e+00> : vector<8x128xf32>
      %34 = vector.multi_reduction <add>, %33, %cst_14 [0] : vector<16x8x128xf32> to vector<8x128xf32>
      %35 = vector.shape_cast %34 : vector<8x128xf32> to vector<1x8x128xf32>
      %36 = arith.addf %13, %35 : vector<1x8x128xf32>
      %c0_15 = arith.constant 0 : index
      %c0_16 = arith.constant 0 : index
      %c0_17 = arith.constant 0 : index
      %37 = vector.load %arg4[%c0_15, %c0_16, %c0_17] : memref<1x8x128xf32, #tpu.memory_space<vmem>>, vector<1x8x128xf32>
      tpu.vector_store %arg4[%c0_15, %c0_16, %c0_17], %36 {strides = array<i32>} : memref<1x8x128xf32, #tpu.memory_space<vmem>>, vector<1x8x128xf32>,
    } else {
    }
    %true = arith.constant true
    %10 = arith.xori %7, %true : i1
    %11 = arith.extui %10 : i1 to i32
    %c0_i32_3 = arith.constant 0 : i32
    %12 = arith.cmpi ne, %11, %c0_i32_3 : i32
    scf.if %12 {
      %c0 = arith.constant 0 : index
      %c0_4 = arith.constant 0 : index
      %c0_5 = arith.constant 0 : index
      %13 = vector.load %arg4[%c0, %c0_4, %c0_5] : memref<1x8x128xf32, #tpu.memory_space<vmem>>, vector<1x8x128xf32>
      %cst = arith.constant 0.000000e+00 : f32
      %14 = vector.broadcast %cst : f32 to vector<128x128xf32>
      %c0_i32_6 = arith.constant 0 : i32
      %c128_i32_7 = arith.constant 128 : i32
      %15 = arith.muli %c0_i32_6, %c128_i32_7 : i32
      %16 = tpu.assume_multiple %15, 128 : i32
      %17 = arith.index_cast %16 : i32 to index
      %c0_8 = arith.constant 0 : index
      %18 = vector.load %arg2[%17, %c0_8] : memref<128x128xf32, #tpu.memory_space<vmem>>, vector<128x128xf32>
      %19 = arith.index_cast %16 : i32 to index
      %c0_9 = arith.constant 0 : index
      %20 = vector.load %arg3[%19, %c0_9] : memref<128x128xf32, #tpu.memory_space<vmem>>, vector<128x128xf32>
      %21 = arith.subf %18, %20 : vector<128x128xf32>
      %22 = arith.mulf %21, %21 : vector<128x128xf32>
      %23 = arith.addf %14, %22 : vector<128x128xf32>
      %c1_i32_10 = arith.constant 1 : i32
      %24 = vector.shape_cast %23 : vector<128x128xf32> to vector<16x8x128xf32>
      %cst_11 = arith.constant dense<0.000000e+00> : vector<8x128xf32>
      %25 = vector.multi_reduction <add>, %24, %cst_11 [0] : vector<16x8x128xf32> to vector<8x128xf32>
      %26 = vector.shape_cast %25 : vector<8x128xf32> to vector<1x8x128xf32>
      %27 = arith.addf %13, %26 : vector<1x8x128xf32>
      %c0_12 = arith.constant 0 : index
      %c0_13 = arith.constant 0 : index
      %c0_14 = arith.constant 0 : index
      %28 = vector.load %arg4[%c0_12, %c0_13, %c0_14] : memref<1x8x128xf32, #tpu.memory_space<vmem>>, vector<1x8x128xf32>
      tpu.vector_store %arg4[%c0_12, %c0_13, %c0_14], %27 {strides = array<i32>} : memref<1x8x128xf32, #tpu.memory_space<vmem>>, vector<1x8x128xf32>,
    } else {
    }
    return
  }
  func.func @transform_0(%arg0: i32, %arg1: i32) -> (i32, i32) {
    %c1_i32 = arith.constant 1 : i32
    %0 = arith.muli %arg0, %c1_i32 : i32
    %1 = arith.addi %0, %arg1 : i32
    %c0_i32 = arith.constant 0 : i32
    %2 = arith.minsi %1, %c0_i32 : i32
    %c0_i32_0 = arith.constant 0 : i32
    %c0_i32_1 = arith.constant 0 : i32
    return %2, %c0_i32_0 : i32, i32
  }
  func.func @transform_1(%arg0: i32, %arg1: i32) -> (i32, i32) {
    %c1_i32 = arith.constant 1 : i32
    %0 = arith.muli %arg0, %c1_i32 : i32
    %1 = arith.addi %0, %arg1 : i32
    %c0_i32 = arith.constant 0 : i32
    %2 = arith.minsi %1, %c0_i32 : i32
    %c0_i32_0 = arith.constant 0 : i32
    %c0_i32_1 = arith.constant 0 : i32
    return %2, %c0_i32_0 : i32, i32
  }
  func.func @transform_2(%arg0: i32, %arg1: i32) -> (i32, i32, i32) {
    %c0_i32 = arith.constant 0 : i32
    %c0_i32_0 = arith.constant 0 : i32
    %c0_i32_1 = arith.constant 0 : i32
    return %arg0, %c0_i32, %c0_i32_0 : i32, i32, i32
  }
}

</mosaic_0001>

<llo_original>
// kernel: autoencoder_loss.1
$region0: #{autoencoder_loss.1}
  #allocation0 [shape = 'u32[]', space=smem, size = 0x4, offset = 0x4, fixed_abs, tag = 'smem constant byte address 0x4 - core index']
  #allocation1 [shape = 'u32[144,128]{1,0:T(1,128)}', space=vmem, size = 0x12000, scoped, tag = 'internal scratch']
  %s0 = inlined_call_operand.vmem [shape: f32[16,128], index: 0, kind: input, shape index: {}]
  %s1 = inlined_call_operand.vmem [shape: f32[16,128], index: 1, kind: input, shape index: {}]
  %s2 = inlined_call_operand.vmem [shape: f32[1,8,128], index: 2, kind: output, shape index: {}]
  %s3 = sld [smem:[#allocation0]]
  $region30: #{autoencoder_loss.1} parent=0
    _
  %s5 = ssub.s32 1, %s3
  %s6 = scalar_select 0, %s5, %s3
  // Predicated region
  $region2: #{autoencoder_loss.1} parent=0 // pred_check
    _
  $region3: #{autoencoder_loss.1} parent=0 // pred_check_branch
    %8 = sbr.rel (0) target = $region5
  $region4: #{autoencoder_loss.1} parent=0 // pred_region
    %s9 = sadd.s32 0, 0
    %p10 = scmp.lt.s32.totalorder %s9, 0
    %s11 = scalar_select %p10, %s9, 0
    %s12 = smul.u32 16, %s11
    %s13 = ssub.s32 2, %s12
    %s14 = smul.u32 128, %s13
    %p15 = scmp.lt.s32.totalorder %s12, 1
    %s16 = scalar_select %p15, %s12, 1
    %s17 = smul.addr %s16, 8
    %s18 = scalar_lea.vmem %s0, %s17
    %s19 = sadd.s32 0, 0
    %p20 = scmp.lt.s32.totalorder %s19, 0
    %s21 = scalar_select %p20, %s19, 0
    %s22 = smul.u32 16, %s21
    %s23 = ssub.s32 2, %s22
    %s24 = smul.u32 128, %s23
  $region5: #{autoencoder_loss.1} parent=0 // pred_fallthru
    _
  // Predicated region
  $region6: #{autoencoder_loss.1} parent=0 // pred_check
    _
  $region7: #{autoencoder_loss.1} parent=0 // pred_check_branch
    %26 = sbr.rel (0) target = $region9
  $region8: #{autoencoder_loss.1} parent=0 // pred_region
    %s27 = sadd.s32 0, 0
    %p28 = scmp.lt.s32.totalorder %s27, 0
    %s29 = scalar_select %p28, %s27, 0
    %s30 = smul.u32 16, %s29
    %s31 = ssub.s32 2, %s30
    %s32 = smul.u32 128, %s31
    %p33 = scmp.lt.s32.totalorder %s30, 1
    %s34 = scalar_select %p33, %s30, 1
    %s35 = smul.addr %s34, 8
    %s36 = scalar_lea.vmem %s1, %s35
    %s37 = sadd.s32 0, 0
    %p38 = scmp.lt.s32.totalorder %s37, 0
    %s39 = scalar_select %p38, %s37, 0
    %s40 = smul.u32 16, %s39
    %s41 = ssub.s32 2, %s40
    %s42 = smul.u32 128, %s41
  $region9: #{autoencoder_loss.1} parent=0 // pred_fallthru
    _
  %s43 = sadd.s32 0, 0
  %p44 = scmp.lt.s32.totalorder %s43, 0
  %s45 = scalar_select %p44, %s43, 0
  %s46 = smul.u32 16, %s45
  %s47 = ssub.s32 2, %s46
  %s48 = smul.u32 128, %s47
  %p49 = scmp.lt.s32.totalorder %s46, 1
  %s50 = scalar_select %p49, %s46, 1
  %s51 = smul.addr %s50, 8
  %s52 = scalar_lea.vmem %s0, %s51
  %s53 = sadd.s32 0, 0
  %p54 = scmp.lt.s32.totalorder %s53, 0
  %s55 = scalar_select %p54, %s53, 0
  %s56 = smul.u32 16, %s55
  %s57 = ssub.s32 2, %s56
  %s58 = smul.u32 128, %s57
  %p59 = scmp.lt.s32.totalorder %s56, 1
  %s60 = scalar_select %p59, %s56, 1
  %s61 = smul.addr %s60, 8
  %s62 = scalar_lea.vmem %s1, %s61
  %s63 = sadd.s32 0, 0
  %p64 = scmp.lt.s32.totalorder %s63, 0
  %s65 = scalar_select %p64, %s63, 0
  %s66 = smul.u32 16, %s65
  %s67 = ssub.s32 2, %s66
  %s68 = smul.u32 128, %s67
  %p69 = scmp.lt.s32.totalorder %s66, 1
  %s70 = scalar_select %p69, %s66, 1
  %s71 = smul.addr %s70, 8
  %s72 = scalar_lea.vmem %s0, %s71
  %s73 = sadd.s32 0, 0
  %p74 = scmp.lt.s32.totalorder %s73, 0
  %s75 = scalar_select %p74, %s73, 0
  %s76 = smul.u32 16, %s75
  %s77 = ssub.s32 2, %s76
  %s78 = smul.u32 128, %s77
  %s79 = sadd.s32 0, 0
  %p80 = scmp.lt.s32.totalorder %s79, 0
  %s81 = scalar_select %p80, %s79, 0
  %s82 = smul.u32 16, %s81
  %s83 = ssub.s32 2, %s82
  %s84 = smul.u32 128, %s83
  %p85 = scmp.lt.s32.totalorder %s82, 1
  %s86 = scalar_select %p85, %s82, 1
  %s87 = smul.addr %s86, 8
  %s88 = scalar_lea.vmem %s1, %s87
  %s89 = sadd.s32 0, 0
  %p90 = scmp.lt.s32.totalorder %s89, 0
  %s91 = scalar_select %p90, %s89, 0
  %s92 = smul.u32 16, %s91
  %s93 = ssub.s32 2, %s92
  %s94 = smul.u32 128, %s93
  %s95 = sadd.s32 0, 0
  %p96 = scmp.eq.s32.totalorder 0, 0
  // Predicated region
  $region10: #{autoencoder_loss.1} parent=0 // pred_check
    %p97 = pneg %p96
  $region11: #{autoencoder_loss.1} parent=0 // pred_check_branch
    %99 = sbr.rel (%p97) target = $region13
  $region12: #{autoencoder_loss.1} parent=0 // pred_region
    %100 = vst [vmem:[%s2] sm:$0xff] 0.0
  $region13: #{autoencoder_loss.1} parent=0 // pred_fallthru
    _
  %s101 = sadd.s32 %s95, 1
  %s102 = smul.u32 %s101, 128
  %p103 = scmp.gt.s32.totalorder %s102, 16
  // Predicated region
  $region14: #{autoencoder_loss.1} parent=0 // pred_check
    %p104 = pneg %p103
  $region15: #{autoencoder_loss.1} parent=0 // pred_check_branch
    %106 = sbr.rel (%p104) target = $region17
  $region16: #{autoencoder_loss.1} parent=0 // pred_region
    %v107 = vld [vmem:[%s2] sm:$0xff]
    %v108 = vld [vmem:[%s72] sm:$0xff]
    %v109 = vld [vmem:[%s72 + $0x8] sm:$0xff]
    %v110 = vld [vmem:[%s72 + $0x10] sm:$0xff]
    %v111 = vld [vmem:[%s72 + $0x18] sm:$0xff]
    %v112 = vld [vmem:[%s72 + $0x20] sm:$0xff]
    %v113 = vld [vmem:[%s72 + $0x28] sm:$0xff]
    %v114 = vld [vmem:[%s72 + $0x30] sm:$0xff]
    %v115 = vld [vmem:[%s72 + $0x38] sm:$0xff]
    %v116 = vld [vmem:[%s72 + $0x40] sm:$0xff]
    %v117 = vld [vmem:[%s72 + $0x48] sm:$0xff]
    %v118 = vld [vmem:[%s72 + $0x50] sm:$0xff]
    %v119 = vld [vmem:[%s72 + $0x58] sm:$0xff]
    %v120 = vld [vmem:[%s72 + $0x60] sm:$0xff]
    %v121 = vld [vmem:[%s72 + $0x68] sm:$0xff]
    %v122 = vld [vmem:[%s72 + $0x70] sm:$0xff]
    %v123 = vld [vmem:[%s72 + $0x78] sm:$0xff]
    %v124 = vld [vmem:[%s88] sm:$0xff]
    %v125 = vld [vmem:[%s88 + $0x8] sm:$0xff]
    %v126 = vld [vmem:[%s88 + $0x10] sm:$0xff]
    %v127 = vld [vmem:[%s88 + $0x18] sm:$0xff]
    %v128 = vld [vmem:[%s88 + $0x20] sm:$0xff]
    %v129 = vld [vmem:[%s88 + $0x28] sm:$0xff]
    %v130 = vld [vmem:[%s88 + $0x30] sm:$0xff]
    %v131 = vld [vmem:[%s88 + $0x38] sm:$0xff]
    %v132 = vld [vmem:[%s88 + $0x40] sm:$0xff]
    %v133 = vld [vmem:[%s88 + $0x48] sm:$0xff]
    %v134 = vld [vmem:[%s88 + $0x50] sm:$0xff]
    %v135 = vld [vmem:[%s88 + $0x58] sm:$0xff]
    %v136 = vld [vmem:[%s88 + $0x60] sm:$0xff]
    %v137 = vld [vmem:[%s88 + $0x68] sm:$0xff]
    %v138 = vld [vmem:[%s88 + $0x70] sm:$0xff]
    %v139 = vld [vmem:[%s88 + $0x78] sm:$0xff]
    %v140 = vsub.f32 %v108, %v124
    %v141 = vsub.f32 %v109, %v125
    %v142 = vsub.f32 %v110, %v126
    %v143 = vsub.f32 %v111, %v127
    %v144 = vsub.f32 %v112, %v128
    %v145 = vsub.f32 %v113, %v129
    %v146 = vsub.f32 %v114, %v130
    %v147 = vsub.f32 %v115, %v131
    %v148 = vsub.f32 %v116, %v132
    %v149 = vsub.f32 %v117, %v133
    %v150 = vsub.f32 %v118, %v134
    %v151 = vsub.f32 %v119, %v135
    %v152 = vsub.f32 %v120, %v136
    %v153 = vsub.f32 %v121, %v137
    %v154 = vsub.f32 %v122, %v138
    %v155 = vsub.f32 %v123, %v139
    %v156 = vmul.f32 %v140, %v140
    %v157 = vmul.f32 %v141, %v141
    %v158 = vmul.f32 %v142, %v142
    %v159 = vmul.f32 %v143, %v143
    %v160 = vmul.f32 %v144, %v144
    %v161 = vmul.f32 %v145, %v145
    %v162 = vmul.f32 %v146, %v146
    %v163 = vmul.f32 %v147, %v147
    %v164 = vmul.f32 %v148, %v148
    %v165 = vmul.f32 %v149, %v149
    %v166 = vmul.f32 %v150, %v150
    %v167 = vmul.f32 %v151, %v151
    %v168 = vmul.f32 %v152, %v152
    %v169 = vmul.f32 %v153, %v153
    %v170 = vmul.f32 %v154, %v154
    %v171 = vmul.f32 %v155, %v155
    %v172 = vlaneseq
    %v173 = vshrl.u32 %v172, 7
    %v174 = vadd.s32 %v173, 8
    %v175 = vadd.s32 %v173, 16
    %v176 = vadd.s32 %v173, 24
    %v177 = vadd.s32 %v173, 32
    %v178 = vadd.s32 %v173, 40
    %v179 = vadd.s32 %v173, 48
    %v180 = vadd.s32 %v173, 56
    %v181 = vadd.s32 %v173, 64
    %v182 = vadd.s32 %v173, 72
    %v183 = vadd.s32 %v173, 80
    %v184 = vadd.s32 %v173, 88
    %v185 = vadd.s32 %v173, 96
    %v186 = vadd.s32 %v173, 104
    %v187 = vadd.s32 %v173, 112
    %v188 = vadd.s32 %v173, 120
    %s189 = smul.u32 %s95, 128
    %s190 = sadd.s32 %s189, 0
    %v191 = vstv %s190
    %v192 = vadd.s32 %v191, %v173
    %v193 = vadd.s32 %v191, %v174
    %v194 = vadd.s32 %v191, %v175
    %v195 = vadd.s32 %v191, %v176
    %v196 = vadd.s32 %v191, %v177
    %v197 = vadd.s32 %v191, %v178
    %v198 = vadd.s32 %v191, %v179
    %v199 = vadd.s32 %v191, %v180
    %v200 = vadd.s32 %v191, %v181
    %v201 = vadd.s32 %v191, %v182
    %v202 = vadd.s32 %v191, %v183
    %v203 = vadd.s32 %v191, %v184
    %v204 = vadd.s32 %v191, %v185
    %v205 = vadd.s32 %v191, %v186
    %v206 = vadd.s32 %v191, %v187
    %v207 = vadd.s32 %v191, %v188
    %vm208 = vcmp.lt.s32.totalorder %v192, 16
    %vm209 = vcmp.lt.s32.totalorder %v193, 16
    %vm210 = vcmp.lt.s32.totalorder %v194, 16
    %vm211 = vcmp.lt.s32.totalorder %v195, 16
    %vm212 = vcmp.lt.s32.totalorder %v196, 16
    %vm213 = vcmp.lt.s32.totalorder %v197, 16
    %vm214 = vcmp.lt.s32.totalorder %v198, 16
    %vm215 = vcmp.lt.s32.totalorder %v199, 16
    %vm216 = vcmp.lt.s32.totalorder %v200, 16
    %vm217 = vcmp.lt.s32.totalorder %v201, 16
    %vm218 = vcmp.lt.s32.totalorder %v202, 16
    %vm219 = vcmp.lt.s32.totalorder %v203, 16
    %vm220 = vcmp.lt.s32.totalorder %v204, 16
    %vm221 = vcmp.lt.s32.totalorder %v205, 16
    %vm222 = vcmp.lt.s32.totalorder %v206, 16
    %vm223 = vcmp.lt.s32.totalorder %v207, 16
    %v224 = vsel %vm208, %v156, 0.0
    %v225 = vsel %vm209, %v157, 0.0
    %v226 = vsel %vm210, %v158, 0.0
    %v227 = vsel %vm211, %v159, 0.0
    %v228 = vsel %vm212, %v160, 0.0
    %v229 = vsel %vm213, %v161, 0.0
    %v230 = vsel %vm214, %v162, 0.0
    %v231 = vsel %vm215, %v163, 0.0
    %v232 = vsel %vm216, %v164, 0.0
    %v233 = vsel %vm217, %v165, 0.0
    %v234 = vsel %vm218, %v166, 0.0
    %v235 = vsel %vm219, %v167, 0.0
    %v236 = vsel %vm220, %v168, 0.0
    %v237 = vsel %vm221, %v169, 0.0
    %v238 = vsel %vm222, %v170, 0.0
    %v239 = vsel %vm223, %v171, 0.0
    %v240 = vadd.f32 %v224, 0.0
    %v241 = vadd.f32 %v225, 0.0
    %v242 = vadd.f32 %v226, 0.0
    %v243 = vadd.f32 %v227, 0.0
    %v244 = vadd.f32 %v228, 0.0
    %v245 = vadd.f32 %v229, 0.0
    %v246 = vadd.f32 %v230, 0.0
    %v247 = vadd.f32 %v231, 0.0
    %v248 = vadd.f32 %v232, 0.0
    %v249 = vadd.f32 %v233, 0.0
    %v250 = vadd.f32 %v234, 0.0
    %v251 = vadd.f32 %v235, 0.0
    %v252 = vadd.f32 %v236, 0.0
    %v253 = vadd.f32 %v237, 0.0
    %v254 = vadd.f32 %v238, 0.0
    %v255 = vadd.f32 %v239, 0.0
    %v256 = vadd.f32 %v240, %v241
    %v257 = vadd.f32 %v256, %v242
    %v258 = vadd.f32 %v257, %v243
    %v259 = vadd.f32 %v258, %v244
    %v260 = vadd.f32 %v259, %v245
    %v261 = vadd.f32 %v260, %v246
    %v262 = vadd.f32 %v261, %v247
    %v263 = vadd.f32 %v262, %v248
    %v264 = vadd.f32 %v263, %v249
    %v265 = vadd.f32 %v264, %v250
    %v266 = vadd.f32 %v265, %v251
    %v267 = vadd.f32 %v266, %v252
    %v268 = vadd.f32 %v267, %v253
    %v269 = vadd.f32 %v268, %v254
    %v270 = vadd.f32 %v269, %v255
    %v271 = vadd.f32 %v107, %v270
    %272 = vst [vmem:[%s2] sm:$0xff] %v271
  $region17: #{autoencoder_loss.1} parent=0 // pred_fallthru
    _
  %p273 = scmp.le.s32.totalorder %s102, 16
  // Predicated region
  $region18: #{autoencoder_loss.1} parent=0 // pred_check
    %p274 = pneg %p273
  $region19: #{autoencoder_loss.1} parent=0 // pred_check_branch
    %276 = sbr.rel (%p274) target = $region21
  $region20: #{autoencoder_loss.1} parent=0 // pred_region
    %v277 = vld [vmem:[%s2] sm:$0xff]
    %v278 = vld [vmem:[%s72] sm:$0xff]
    %v279 = vld [vmem:[%s72 + $0x8] sm:$0xff]
    %v280 = vld [vmem:[%s72 + $0x10] sm:$0xff]
    %v281 = vld [vmem:[%s72 + $0x18] sm:$0xff]
    %v282 = vld [vmem:[%s72 + $0x20] sm:$0xff]
    %v283 = vld [vmem:[%s72 + $0x28] sm:$0xff]
    %v284 = vld [vmem:[%s72 + $0x30] sm:$0xff]
    %v285 = vld [vmem:[%s72 + $0x38] sm:$0xff]
    %v286 = vld [vmem:[%s72 + $0x40] sm:$0xff]
    %v287 = vld [vmem:[%s72 + $0x48] sm:$0xff]
    %v288 = vld [vmem:[%s72 + $0x50] sm:$0xff]
    %v289 = vld [vmem:[%s72 + $0x58] sm:$0xff]
    %v290 = vld [vmem:[%s72 + $0x60] sm:$0xff]
    %v291 = vld [vmem:[%s72 + $0x68] sm:$0xff]
    %v292 = vld [vmem:[%s72 + $0x70] sm:$0xff]
    %v293 = vld [vmem:[%s72 + $0x78] sm:$0xff]
    %v294 = vld [vmem:[%s88] sm:$0xff]
    %v295 = vld [vmem:[%s88 + $0x8] sm:$0xff]
    %v296 = vld [vmem:[%s88 + $0x10] sm:$0xff]
    %v297 = vld [vmem:[%s88 + $0x18] sm:$0xff]
    %v298 = vld [vmem:[%s88 + $0x20] sm:$0xff]
    %v299 = vld [vmem:[%s88 + $0x28] sm:$0xff]
    %v300 = vld [vmem:[%s88 + $0x30] sm:$0xff]
    %v301 = vld [vmem:[%s88 + $0x38] sm:$0xff]
    %v302 = vld [vmem:[%s88 + $0x40] sm:$0xff]
    %v303 = vld [vmem:[%s88 + $0x48] sm:$0xff]
    %v304 = vld [vmem:[%s88 + $0x50] sm:$0xff]
    %v305 = vld [vmem:[%s88 + $0x58] sm:$0xff]
    %v306 = vld [vmem:[%s88 + $0x60] sm:$0xff]
    %v307 = vld [vmem:[%s88 + $0x68] sm:$0xff]
    %v308 = vld [vmem:[%s88 + $0x70] sm:$0xff]
    %v309 = vld [vmem:[%s88 + $0x78] sm:$0xff]
    %v310 = vsub.f32 %v278, %v294
    %v311 = vsub.f32 %v279, %v295
    %v312 = vsub.f32 %v280, %v296
    %v313 = vsub.f32 %v281, %v297
    %v314 = vsub.f32 %v282, %v298
    %v315 = vsub.f32 %v283, %v299
    %v316 = vsub.f32 %v284, %v300
    %v317 = vsub.f32 %v285, %v301
    %v318 = vsub.f32 %v286, %v302
    %v319 = vsub.f32 %v287, %v303
    %v320 = vsub.f32 %v288, %v304
    %v321 = vsub.f32 %v289, %v305
    %v322 = vsub.f32 %v290, %v306
    %v323 = vsub.f32 %v291, %v307
    %v324 = vsub.f32 %v292, %v308
    %v325 = vsub.f32 %v293, %v309
    %v326 = vmul.f32 %v310, %v310
    %v327 = vmul.f32 %v311, %v311
    %v328 = vmul.f32 %v312, %v312
    %v329 = vmul.f32 %v313, %v313
    %v330 = vmul.f32 %v314, %v314
    %v331 = vmul.f32 %v315, %v315
    %v332 = vmul.f32 %v316, %v316
    %v333 = vmul.f32 %v317, %v317
    %v334 = vmul.f32 %v318, %v318
    %v335 = vmul.f32 %v319, %v319
    %v336 = vmul.f32 %v320, %v320
    %v337 = vmul.f32 %v321, %v321
    %v338 = vmul.f32 %v322, %v322
    %v339 = vmul.f32 %v323, %v323
    %v340 = vmul.f32 %v324, %v324
    %v341 = vmul.f32 %v325, %v325
    %v342 = vadd.f32 %v326, 0.0
    %v343 = vadd.f32 %v327, 0.0
    %v344 = vadd.f32 %v328, 0.0
    %v345 = vadd.f32 %v329, 0.0
    %v346 = vadd.f32 %v330, 0.0
    %v347 = vadd.f32 %v331, 0.0
    %v348 = vadd.f32 %v332, 0.0
    %v349 = vadd.f32 %v333, 0.0
    %v350 = vadd.f32 %v334, 0.0
    %v351 = vadd.f32 %v335, 0.0
    %v352 = vadd.f32 %v336, 0.0
    %v353 = vadd.f32 %v337, 0.0
    %v354 = vadd.f32 %v338, 0.0
    %v355 = vadd.f32 %v339, 0.0
    %v356 = vadd.f32 %v340, 0.0
    %v357 = vadd.f32 %v341, 0.0
    %v358 = vadd.f32 %v342, %v343
    %v359 = vadd.f32 %v358, %v344
    %v360 = vadd.f32 %v359, %v345
    %v361 = vadd.f32 %v360, %v346
    %v362 = vadd.f32 %v361, %v347
    %v363 = vadd.f32 %v362, %v348
    %v364 = vadd.f32 %v363, %v349
    %v365 = vadd.f32 %v364, %v350
    %v366 = vadd.f32 %v365, %v351
    %v367 = vadd.f32 %v366, %v352
    %v368 = vadd.f32 %v367, %v353
    %v369 = vadd.f32 %v368, %v354
    %v370 = vadd.f32 %v369, %v355
    %v371 = vadd.f32 %v370, %v356
    %v372 = vadd.f32 %v371, %v357
    %v373 = vadd.f32 %v277, %v372
    %374 = vst [vmem:[%s2] sm:$0xff] %v373
  $region21: #{autoencoder_loss.1} parent=0 // pred_fallthru
    _
  // Predicated region
  $region22: #{autoencoder_loss.1} parent=0 // pred_check
    _
  $region23: #{autoencoder_loss.1} parent=0 // pred_check_branch
    %376 = sbr.rel (0) target = $region25
  $region24: #{autoencoder_loss.1} parent=0 // pred_region
    _
  $region25: #{autoencoder_loss.1} parent=0 // pred_fallthru
    _
  // Predicated region
  $region26: #{autoencoder_loss.1} parent=0 // pred_check
    _
  $region27: #{autoencoder_loss.1} parent=0 // pred_check_branch
    %378 = sbr.rel (0) target = $region29
  $region28: #{autoencoder_loss.1} parent=0 // pred_region
    _
  $region29: #{autoencoder_loss.1} parent=0 // pred_fallthru
    _

</llo_original>
